<compile_context>
chip_gen: v6e
topology: v6e:2x2x1
jax: 0.10.0
libtpu: 0.0.40
codegen_flags: <defaults>
</compile_context>

<pallas_src>
import functools
import math

import jax
import jax.numpy as jnp
import numpy as np
from jax.experimental import pallas as pl
from jax.experimental.pallas import tpu as pltpu


def _round_up(n, m):
    return ((n + m - 1) // m) * m


# ---------------------------------------------------------------------------
# Kernel body: one (tb, Dp) x (Dp, 2*tk) MXU matmul + a lane-dense (tb, tk)
# elementwise chain with a single exact division.  All per-class constants
# arrive pre-folded in an (8, tk) table; the per-row c*|x|^2 arrives as a
# (tb, 1) column, so no cross-lane reductions happen inside the kernel.
# ---------------------------------------------------------------------------
def _hyperbolic_mlr_kernel(x_ref, cy2_ref, w_ref, sc_ref, out_ref, *, c, tk):
    c = jnp.float32(c)

    # Single MXU matmul against the concatenated [(-P)^T | A^T] operand.
    both = jnp.dot(x_ref[...], w_ref[...],
                   preferred_element_type=jnp.float32)      # (tb, 2*tk) f32
    xy = both[:, :tk]                                        # x . (-P)
    xa = both[:, tk:]                                        # x . A

    cy2 = cy2_ref[...]                                       # (tb, 1) = c*|x|^2

    sc = sc_ref[...]                                         # (8, tk) f32
    cx2 = sc[0:1, :]      # c * |P|^2
    conf = sc[1:2, :]     # 1 - c*|P|^2        (conformal factor)
    conf2 = sc[2:3, :]    # (1 - c*|P|^2)^2
    pa_s = sc[3:4, :]     # 2*sqrt(c) * ((-P).A) / |A|
    conf_s = sc[4:5, :]   # 2*sqrt(c) * (1 - c*|P|^2) / |A|
    k_vec = sc[5:6, :]    # 2*|A| / ((1 - c*|P|^2) * sqrt(c))

    t2 = (2.0 * c) * xy                       # 2*c*<-P, x>
    num_coef = 1.0 + t2 + cy2                 # (tb, tk)
    denom_ma = (1.0 + 1e-5) + t2 + cx2 * cy2  # Mobius denominator (+1e-5 as ref)

    # c * |mobius_add(-P, x)|^2 * denom_ma^2, expanded analytically with the
    # per-class constants already folded in (cQ = c*Q of the reference).
    cq = (num_coef * num_coef) * cx2 + (num_coef * conf) * t2 + conf2 * cy2

    numer = (num_coef * pa_s + conf_s * xa) * denom_ma
    denomer = denom_ma * denom_ma - cq

    # Single EXACT division (replaces the two approx reciprocals of the old
    # kernel, which produced ~1% relative error and failed the tolerance).
    ratio = numer / denomer

    # arsinh with the reference's clamp_min(1e-5) before the log.
    arsinh_v = jnp.log(jnp.maximum(ratio + jnp.sqrt(1.0 + ratio * ratio), 1e-5))
    out_ref[...] = (k_vec * arsinh_v).astype(out_ref.dtype)


# ---------------------------------------------------------------------------
# Class-side preprocessing (depends only on the parameters): expmap0 of
# p_vals, conformal rescale of a_vals, and the folded per-class scalar table.
# ---------------------------------------------------------------------------
def _class_preprocess(a_vals, p_vals, c, Kp, Dp, tk, mm_dtype):
    c = jnp.float32(c)
    sqrt_c = jnp.sqrt(c)
    a = a_vals.astype(jnp.float32)
    p = p_vals.astype(jnp.float32)
    K, D = a.shape

    # expmap0(p_vals, c)
    p_norm = jnp.maximum(jnp.sqrt(jnp.sum(p * p, axis=-1, keepdims=True)), 1e-5)
    gamma = jnp.tanh(jnp.clip(sqrt_c * p_norm, -15.0, 15.0))
    P = gamma * p / (sqrt_c * p_norm)                      # p_vals_poincare (K, D)

    P2 = jnp.sum(P * P, axis=-1, keepdims=True)
    conf = 1.0 - c * P2                                    # conformal factor
    A = a * conf                                           # a_vals_poincare (K, D)
    mx = -P

    pa = jnp.sum(mx * A, axis=-1, keepdims=True)           # (-P) . A
    a_norm = jnp.sqrt(jnp.sum(A * A, axis=-1, keepdims=True))

    cx2 = c * P2
    conf2 = conf * conf
    pa_s = 2.0 * sqrt_c * pa / a_norm
    conf_s = 2.0 * sqrt_c * conf / a_norm
    k_vec = 2.0 * a_norm / (conf * sqrt_c)

    pad_k = Kp - K

    def row(v):
        # Padded classes get 0 everywhere -> kernel produces finite zeros.
        return jnp.pad(v[:, 0], (0, pad_k))

    zeros = jnp.zeros((Kp,), jnp.float32)
    scalars = jnp.stack([row(cx2), row(conf), row(conf2),
                         row(pa_s), row(conf_s), row(k_vec),
                         zeros, zeros], axis=0)             # (8, Kp)

    # Concatenated MXU operand: for every tk-wide class tile j, its 2*tk
    # columns are [(-P)^T tile j | A^T tile j].  D zero-padded to Dp lanes.
    mxT = jnp.pad(mx, ((0, pad_k), (0, Dp - D))).T          # (Dp, Kp)
    aT = jnp.pad(A, ((0, pad_k), (0, Dp - D))).T            # (Dp, Kp)
    nkt = Kp // tk
    w = jnp.concatenate(
        [mxT.reshape(Dp, nkt, 1, tk), aT.reshape(Dp, nkt, 1, tk)],
        axis=2).reshape(Dp, 2 * Kp).astype(mm_dtype)
    return w, scalars


def hyperbolic_mlr(x, a_vals, p_vals, c, *,
                   tile_b=256, tile_k=512,
                   class_resident_bytes=8 * 1024 * 1024,
                   vmem_limit_bytes=48 * 1024 * 1024):
    B, D = x.shape
    K, Dk = a_vals.shape
    assert D == Dk
    assert tile_b % 8 == 0 and tile_k % 128 == 0
    out_dtype = x.dtype

    # Keep MXU operands bf16 if x arrives bf16 (f32 accumulation either way).
    mm_dtype = jnp.bfloat16 if x.dtype == jnp.bfloat16 else jnp.float32
    mm_bytes = 2 if mm_dtype == jnp.bfloat16 else 4

    Dp = _round_up(D, 128)          # full-lane contraction dim
    Kp = _round_up(K, 128)          # lane-dense output / unmasked stores

    # Class-operand residency: if [(-P)^T | A^T] + scalar table fit the VMEM
    # budget even double-buffered, use one class tile so they are DMA'd once
    # and stay resident for the whole batch sweep.
    resident_cost = 2 * (Dp * 2 * Kp * mm_bytes + 8 * Kp * 4)
    if resident_cost <= class_resident_bytes:
        tk = Kp
    else:
        tk = min(tile_k, Kp)
        Kp = _round_up(Kp, tk)

    # Batch tile, area-capped so the (tb, 2*tk) f32 intermediates stay well
    # inside v7x's 64 MiB VMEM even with the conservative 48 MiB limit.
    max_tile_elems = 256 * 512
    tb = min(tile_b, _round_up(B, 8))
    if tb * tk > max_tile_elems:
        tb = max(8, (max_tile_elems // tk) // 8 * 8)
    Bp = _round_up(_round_up(B, 8), tb)

    n_bt = Bp // tb
    n_kt = Kp // tk

    w, scalars = _class_preprocess(a_vals, p_vals, c, Kp, Dp, tk, mm_dtype)

    # Per-row c*|x|^2 computed once, in f32, in the wrapper.
    xf = x.astype(jnp.float32)
    cy2 = jnp.float32(c) * jnp.sum(xf * xf, axis=-1, keepdims=True)  # (B, 1)
    cy2 = jnp.pad(cy2, ((0, Bp - B), (0, 0)))

    xp = jnp.pad(x, ((0, Bp - B), (0, Dp - D)))   # zero-pad rows + D lanes

    # Grid ordering: stream whichever operand is cheaper to re-read.
    class_bytes = Dp * 2 * Kp * mm_bytes + 8 * Kp * 4
    x_bytes = Bp * Dp * mm_bytes + Bp * 4
    batch_outer_extra = (n_bt - 1) * class_bytes if n_kt > 1 else 0
    class_outer_extra = (n_kt - 1) * x_bytes if n_bt > 1 else 0
    class_major = class_outer_extra < batch_outer_extra

    if class_major:
        grid = (n_kt, n_bt)
        x_map = lambda j, i: (i, 0)
        c_map = lambda j, i: (i, 0)
        w_map = lambda j, i: (0, j)
        s_map = lambda j, i: (0, j)
        o_map = lambda j, i: (i, j)
    else:
        grid = (n_bt, n_kt)
        x_map = lambda i, j: (i, 0)
        c_map = lambda i, j: (i, 0)
        w_map = lambda i, j: (0, j)
        s_map = lambda i, j: (0, j)
        o_map = lambda i, j: (i, j)

    cost = pl.CostEstimate(
        flops=int(2 * Bp * (2 * Kp) * Dp + 30 * Bp * Kp),
        transcendentals=int(3 * Bp * Kp),
        bytes_accessed=int(x_bytes + class_bytes
                           + Bp * Kp * jnp.dtype(out_dtype).itemsize),
    )

    kernel = functools.partial(_hyperbolic_mlr_kernel, c=float(c), tk=tk)
    out = pl.pallas_call(
        kernel,
        out_shape=jax.ShapeDtypeStruct((Bp, Kp), out_dtype),
        grid_spec=pltpu.PrefetchScalarGridSpec(
            num_scalar_prefetch=0,
            grid=grid,
            in_specs=[
                pl.BlockSpec((tb, Dp), x_map),       # x row tile
                pl.BlockSpec((tb, 1), c_map),        # c*|x|^2 per row
                pl.BlockSpec((Dp, 2 * tk), w_map),   # [(-P)^T | A^T] class tile
                pl.BlockSpec((8, tk), s_map),        # folded per-class scalars
            ],
            out_specs=pl.BlockSpec((tb, tk), o_map),
        ),
        compiler_params=pltpu.CompilerParams(
            dimension_semantics=("parallel", "parallel"),
            vmem_limit_bytes=vmem_limit_bytes,
        ),
        cost_estimate=cost,
    )(xp, cy2, w, scalars)
    return out[:B, :K]


# ---------------- pure-JAX reference (mirrors the PyTorch math) -------------
def _reference_forward(x, a_vals, p_vals, c):
    c = jnp.float32(c)
    sqrt_c = jnp.sqrt(c)
    hp = jax.lax.Precision.HIGHEST
    u_norm = jnp.maximum(jnp.linalg.norm(p_vals, axis=-1, keepdims=True), 1e-5)
    P = jnp.tanh(jnp.clip(sqrt_c * u_norm, -15.0, 15.0)) * p_vals / (sqrt_c * u_norm)
    conformal = 1.0 - c * jnp.sum(P ** 2, axis=1, keepdims=True)
    A = a_vals * conformal

    mx = -P
    xy = jnp.einsum('ij,kj->ik', mx, x, precision=hp)        # (K, B)
    x2 = jnp.sum(mx ** 2, axis=-1, keepdims=True)            # (K, 1)
    y2 = jnp.sum(x ** 2, axis=-1, keepdims=True)              # (B, 1)
    num = 1.0 + 2.0 * c * xy + c * y2.T
    num = num[:, :, None] * mx[:, None, :] + (1.0 - c * x2)[:, :, None] * x[None, :, :]
    denom = 1.0 + 2.0 * c * xy + c ** 2 * x2 * y2.T
    mob = num / (denom[:, :, None] + 1e-5)                    # (K, B, D)

    lambda_pkc = 2.0 / (1.0 - c * jnp.sum(P ** 2, axis=1))
    a_norm = jnp.linalg.norm(A, axis=1)
    k = lambda_pkc * a_norm / sqrt_c
    num_hs = 2.0 * sqrt_c * jnp.sum(mob * A[:, None, :], axis=-1)
    denom_hs = a_norm[:, None] * (1.0 - c * jnp.sum(mob ** 2, axis=2))
    ratio = num_hs / denom_hs
    arsinh = jnp.log(jnp.maximum(ratio + jnp.sqrt(1.0 + ratio ** 2), 1e-5))
    logit = k[:, None] * arsinh
    return logit.T


def _make_inputs(key, batch, ball_dim, n_classes, scale=0.05):
    k_a, k_p, k_x = jax.random.split(key, 3)
    # kaiming_uniform_(a=sqrt(5)) on (n_classes, ball_dim) => U(+-1/sqrt(fan_in))
    bound = 1.0 / math.sqrt(ball_dim)
    a_vals = jax.random.uniform(k_a, (n_classes, ball_dim), jnp.float32, -bound, bound)
    p_vals = jax.random.uniform(k_p, (n_classes, ball_dim), jnp.float32, -bound, bound)
    # Points well inside the Poincare ball.
    x = scale * jax.random.normal(k_x, (batch, ball_dim), jnp.float32)
    return x, a_vals, p_vals


if __name__ == "__main__":
    key = jax.random.PRNGKey(0)
    keys = jax.random.split(key, 3)

    configs = [
        # 1) tiny case: class operand fully VMEM-resident, single class tile.
        dict(batch=8, ball_dim=32, n_classes=16, c=1.0, kwargs={}),
        # 2) force the streamed, class-major multi-tile path.
        dict(batch=48, ball_dim=96, n_classes=200, c=0.9,
             kwargs=dict(tile_b=16, tile_k=128, class_resident_bytes=0)),
        # 3) force the streamed, batch-major multi-tile path.
        dict(batch=16, ball_dim=64, n_classes=300, c=0.5,
             kwargs=dict(tile_b=16, tile_k=128, class_resident_bytes=0)),
    ]

    for cfg, k in zip(configs, keys):
        x, a_vals, p_vals = _make_inputs(k, cfg["batch"], cfg["ball_dim"],
                                         cfg["n_classes"])
        logits = hyperbolic_mlr(x, a_vals, p_vals, cfg["c"], **cfg["kwargs"])
        logits = jax.block_until_ready(logits)
        assert logits.shape == (cfg["batch"], cfg["n_classes"])

        ref = _reference_forward(x, a_vals, p_vals, cfg["c"])
        np.testing.assert_allclose(np.asarray(logits), np.asarray(ref),
                                   rtol=5e-3, atol=5e-3)

    print("KERNEL_OK")
</pallas_src>

<mosaic_0001>
module attributes {stable_mosaic.version = 11 : i64} {
  func.func @_hyperbolic_mlr_kernel(%arg0: i32, %arg1: i32, %arg2: memref<8x128xf32, #tpu.memory_space<vmem>>, %arg3: memref<8x1xf32, #tpu.memory_space<vmem>>, %arg4: memref<128x256xf32, #tpu.memory_space<vmem>>, %arg5: memref<8x128xf32, #tpu.memory_space<vmem>>, %arg6: memref<8x128xf32, #tpu.memory_space<vmem>>) attributes {dimension_semantics = [#tpu.dimension_semantics<parallel>, #tpu.dimension_semantics<parallel>], iteration_bounds = array<i64: 1, 1>, scalar_prefetch = 0 : i64, scratch_operands = 0 : i64, tpu.core_type = #tpu.core_type<tc>, window_params = [{transform_indices = @transform_0, window_bounds = array<i64: 8, 128>}, {transform_indices = @transform_1, window_bounds = array<i64: 8, 1>}, {transform_indices = @transform_2, window_bounds = array<i64: 128, 256>}, {transform_indices = @transform_3, window_bounds = array<i64: 8, 128>}, {transform_indices = @transform_4, window_bounds = array<i64: 8, 128>}]} {
    %c0 = arith.constant 0 : index
    %c0_0 = arith.constant 0 : index
    %0 = vector.load %arg2[%c0, %c0_0] : memref<8x128xf32, #tpu.memory_space<vmem>>, vector<8x128xf32>
    %c0_1 = arith.constant 0 : index
    %c0_2 = arith.constant 0 : index
    %1 = vector.load %arg4[%c0_1, %c0_2] : memref<128x256xf32, #tpu.memory_space<vmem>>, vector<128x256xf32>
    %cst = arith.constant dense<0.000000e+00> : vector<8x256xf32>
    %2 = tpu.matmul %0, %1, %cst {dimension_numbers = #tpu.dot_dimension_numbers<[1], [0], [0], [1], [0, 0, 1, 1], [], []>} : vector<8x128xf32>, vector<128x256xf32>, vector<8x256xf32> -> vector<8x256xf32>
    %3 = vector.extract_strided_slice %2 {offsets = [0, 0], sizes = [8, 128], strides = [1, 1]} : vector<8x256xf32> to vector<8x128xf32>
    %4 = vector.extract_strided_slice %2 {offsets = [0, 128], sizes = [8, 128], strides = [1, 1]} : vector<8x256xf32> to vector<8x128xf32>
    %c0_3 = arith.constant 0 : index
    %c0_4 = arith.constant 0 : index
    %5 = vector.load %arg3[%c0_3, %c0_4] : memref<8x1xf32, #tpu.memory_space<vmem>>, vector<8x1xf32>
    %c0_5 = arith.constant 0 : index
    %c0_6 = arith.constant 0 : index
    %6 = vector.load %arg5[%c0_5, %c0_6] : memref<8x128xf32, #tpu.memory_space<vmem>>, vector<8x128xf32>
    %7 = vector.extract_strided_slice %6 {offsets = [0, 0], sizes = [1, 128], strides = [1, 1]} : vector<8x128xf32> to vector<1x128xf32>
    %8 = vector.extract_strided_slice %6 {offsets = [1, 0], sizes = [1, 128], strides = [1, 1]} : vector<8x128xf32> to vector<1x128xf32>
    %9 = vector.extract_strided_slice %6 {offsets = [2, 0], sizes = [1, 128], strides = [1, 1]} : vector<8x128xf32> to vector<1x128xf32>
    %10 = vector.extract_strided_slice %6 {offsets = [3, 0], sizes = [1, 128], strides = [1, 1]} : vector<8x128xf32> to vector<1x128xf32>
    %11 = vector.extract_strided_slice %6 {offsets = [4, 0], sizes = [1, 128], strides = [1, 1]} : vector<8x128xf32> to vector<1x128xf32>
    %12 = vector.extract_strided_slice %6 {offsets = [5, 0], sizes = [1, 128], strides = [1, 1]} : vector<8x128xf32> to vector<1x128xf32>
    %cst_7 = arith.constant 2.000000e+00 : f32
    %cst_8 = arith.constant 1.000000e+00 : f32
    %13 = arith.mulf %cst_7, %cst_8 : f32
    %14 = vector.broadcast %13 : f32 to vector<8x128xf32>
    %15 = arith.mulf %14, %3 : vector<8x128xf32>
    %cst_9 = arith.constant 1.000000e+00 : f32
    %16 = vector.broadcast %cst_9 : f32 to vector<8x128xf32>
    %17 = arith.addf %16, %15 : vector<8x128xf32>
    %18 = vector.broadcast %5 : vector<8x1xf32> to vector<8x128xf32>
    %19 = arith.addf %17, %18 : vector<8x128xf32>
    %cst_10 = arith.constant 1.000010e+00 : f32
    %20 = vector.broadcast %cst_10 : f32 to vector<8x128xf32>
    %21 = arith.addf %20, %15 : vector<8x128xf32>
    %22 = vector.broadcast %7 : vector<1x128xf32> to vector<8x128xf32>
    %23 = vector.broadcast %5 : vector<8x1xf32> to vector<8x128xf32>
    %24 = arith.mulf %22, %23 : vector<8x128xf32>
    %25 = arith.addf %21, %24 : vector<8x128xf32>
    %26 = arith.mulf %19, %19 : vector<8x128xf32>
    %27 = vector.broadcast %7 : vector<1x128xf32> to vector<8x128xf32>
    %28 = arith.mulf %26, %27 : vector<8x128xf32>
    %29 = vector.broadcast %8 : vector<1x128xf32> to vector<8x128xf32>
    %30 = arith.mulf %19, %29 : vector<8x128xf32>
    %31 = arith.mulf %30, %15 : vector<8x128xf32>
    %32 = arith.addf %28, %31 : vector<8x128xf32>
    %33 = vector.broadcast %9 : vector<1x128xf32> to vector<8x128xf32>
    %34 = vector.broadcast %5 : vector<8x1xf32> to vector<8x128xf32>
    %35 = arith.mulf %33, %34 : vector<8x128xf32>
    %36 = arith.addf %32, %35 : vector<8x128xf32>
    %37 = vector.broadcast %10 : vector<1x128xf32> to vector<8x128xf32>
    %38 = arith.mulf %19, %37 : vector<8x128xf32>
    %39 = vector.broadcast %11 : vector<1x128xf32> to vector<8x128xf32>
    %40 = arith.mulf %39, %4 : vector<8x128xf32>
    %41 = arith.addf %38, %40 : vector<8x128xf32>
    %42 = arith.mulf %41, %25 : vector<8x128xf32>
    %43 = arith.mulf %25, %25 : vector<8x128xf32>
    %44 = arith.subf %43, %36 : vector<8x128xf32>
    %45 = arith.divf %42, %44 : vector<8x128xf32>
    %46 = arith.mulf %45, %45 : vector<8x128xf32>
    %cst_11 = arith.constant 1.000000e+00 : f32
    %47 = vector.broadcast %cst_11 : f32 to vector<8x128xf32>
    %48 = arith.addf %47, %46 : vector<8x128xf32>
    %49 = math.sqrt %48 : vector<8x128xf32>
    %50 = arith.addf %45, %49 : vector<8x128xf32>
    %cst_12 = arith.constant 9.99999974E-6 : f32
    %51 = vector.broadcast %cst_12 : f32 to vector<8x128xf32>
    %52 = arith.maximumf %50, %51 : vector<8x128xf32>
    %53 = math.log %52 : vector<8x128xf32>
    %54 = vector.broadcast %12 : vector<1x128xf32> to vector<8x128xf32>
    %55 = arith.mulf %54, %53 : vector<8x128xf32>
    %c0_13 = arith.constant 0 : index
    %c0_14 = arith.constant 0 : index
    %56 = vector.load %arg6[%c0_13, %c0_14] : memref<8x128xf32, #tpu.memory_space<vmem>>, vector<8x128xf32>
    tpu.vector_store %arg6[%c0_13, %c0_14], %55 {strides = array<i32>} : memref<8x128xf32, #tpu.memory_space<vmem>>, vector<8x128xf32>,
    return
  }
  func.func @transform_0(%arg0: i32, %arg1: i32) -> (i32, i32) {
    %c0_i32 = arith.constant 0 : i32
    %c0_i32_0 = arith.constant 0 : i32
    return %arg0, %c0_i32 : i32, i32
  }
  func.func @transform_1(%arg0: i32, %arg1: i32) -> (i32, i32) {
    %c0_i32 = arith.constant 0 : i32
    %c0_i32_0 = arith.constant 0 : i32
    return %arg0, %c0_i32 : i32, i32
  }
  func.func @transform_2(%arg0: i32, %arg1: i32) -> (i32, i32) {
    %c0_i32 = arith.constant 0 : i32
    %c0_i32_0 = arith.constant 0 : i32
    return %c0_i32, %arg1 : i32, i32
  }
  func.func @transform_3(%arg0: i32, %arg1: i32) -> (i32, i32) {
    %c0_i32 = arith.constant 0 : i32
    %c0_i32_0 = arith.constant 0 : i32
    return %c0_i32, %arg1 : i32, i32
  }
  func.func @transform_4(%arg0: i32, %arg1: i32) -> (i32, i32) {
    %c0_i32 = arith.constant 0 : i32
    return %arg0, %arg1 : i32, i32
  }
}

</mosaic_0001>

<llo_original>
// kernel: tpu_custom_call.1
$region0: #{tpu_custom_call.1}
  #allocation0 [shape = 'u32[]', space=smem, size = 0x4, offset = 0x4, fixed_abs, tag = 'smem constant byte address 0x4 - core index']
  #allocation1 [shape = 'u32[144,128]{1,0:T(1,128)}', space=vmem, size = 0x12000, scoped, tag = 'internal scratch']
  %s0 = inlined_call_operand.vmem [shape: f32[8,128], index: 0, kind: input, shape index: {}]
  %s1 = inlined_call_operand.vmem [shape: f32[8,1], index: 1, kind: input, shape index: {}]
  %s2 = inlined_call_operand.hbm [shape: f32[128,256], index: 2, kind: input, shape index: {}]
  %s3 = inlined_call_operand.hbm [shape: f32[8,128], index: 3, kind: input, shape index: {}]
  %s4 = inlined_call_operand.hbm [shape: f32[8,128], index: 4, kind: output, shape index: {}]
  %s5 = sld [smem:[#allocation0]]
  $region34: #{tpu_custom_call.1} parent=0
    _
  %s7 = ssub.s32 1, %s5
  %s8 = scalar_select 0, %s7, %s5
  $region1: #{tpu_custom_call.1} parent=0
    #allocation2 [shape = 'u8[131072]{0}', space=vmem, size = 0x20000, scoped, tag = 'input window, operand 2, single buffered']
    #allocation3 [shape = 's32[1]{0}', space=sflag, size = 0x4, scoped, tag = 'scoped memory for tpu_custom_call.1']
    #allocation4 [shape = 's32[1]{0}', space=sflag, size = 0x4, scoped, tag = 'scoped memory for tpu_custom_call.1']
    #allocation5 [shape = 'u8[4096]{0}', space=vmem, size = 0x1000, scoped, tag = 'input window, operand 3, single buffered']
    #allocation6 [shape = 's32[1]{0}', space=sflag, size = 0x4, scoped, tag = 'scoped memory for tpu_custom_call.1']
    #allocation7 [shape = 'u8[4096]{0}', space=vmem, size = 0x1000, scoped, tag = 'output window, operand 0, single buffered']
    %9 = vsyncpa [#allocation3], 0
    %10 = vsyncpa [#allocation6], 0
    %11 = vsyncpa [#allocation4], 0
    // Predicated region
    $region2: #{tpu_custom_call.1} parent=1 // pred_check
      _
    $region3: #{tpu_custom_call.1} parent=1 // pred_check_branch
      %13 = sbr.rel (0) target = $region5
    $region4: #{tpu_custom_call.1} parent=1 // pred_region
      _
    $region5: #{tpu_custom_call.1} parent=1 // pred_fallthru
      _
    // Predicated region
    $region6: #{tpu_custom_call.1} parent=1 // pred_check
      _
    $region7: #{tpu_custom_call.1} parent=1 // pred_check_branch
      %15 = sbr.rel (0) target = $region9
    $region8: #{tpu_custom_call.1} parent=1 // pred_region
      _
    $region9: #{tpu_custom_call.1} parent=1 // pred_fallthru
      _
    // Predicated region
    $region10: #{tpu_custom_call.1} parent=1 // pred_check
      _
    $region11: #{tpu_custom_call.1} parent=1 // pred_check_branch
      %17 = sbr.rel (0) target = $region13
    $region12: #{tpu_custom_call.1} parent=1 // pred_region
      %s19 = ssub.s32 4096, 4096
      %20 = vsyncadd [#allocation3], %s19
      %s21 = sshll.u32 [#allocation2], 4
      %s22 = int_to_ptr.vmem [resolvable:$true] %s21
      %27 = dma.hbm_to_vmem [thread:$0]  %s2, 4096, %s22, [#allocation3], 256, 256, 16
    $region13: #{tpu_custom_call.1} parent=1 // pred_fallthru
      _
    // Predicated region
    $region14: #{tpu_custom_call.1} parent=1 // pred_check
      _
    $region15: #{tpu_custom_call.1} parent=1 // pred_check_branch
      %29 = sbr.rel (0) target = $region17
    $region16: #{tpu_custom_call.1} parent=1 // pred_region
      %s31 = ssub.s32 128, 128
      %32 = vsyncadd [#allocation6], %s31
      %s34 = sshll.u32 [#allocation5], 4
      %s35 = int_to_ptr.vmem [resolvable:$true] %s34
      %37 = dma.hbm_to_vmem [thread:$0]  %s3, 128, %s35, [#allocation6]
    $region17: #{tpu_custom_call.1} parent=1 // pred_fallthru
      _
    // Predicated region
    $region18: #{tpu_custom_call.1} parent=1 // pred_check
      _
    $region19: #{tpu_custom_call.1} parent=1 // pred_check_branch
      %39 = sbr.rel (0) target = $region21
    $region20: #{tpu_custom_call.1} parent=1 // pred_region
      %40 = dma.done [#allocation3], 4096
    $region21: #{tpu_custom_call.1} parent=1 // pred_fallthru
      _
    // Predicated region
    $region22: #{tpu_custom_call.1} parent=1 // pred_check
      _
    $region23: #{tpu_custom_call.1} parent=1 // pred_check_branch
      %42 = sbr.rel (0) target = $region25
    $region24: #{tpu_custom_call.1} parent=1 // pred_region
      %43 = dma.done [#allocation6], 128
    $region25: #{tpu_custom_call.1} parent=1 // pred_fallthru
      _
    %v44 = vld [vmem:[%s0] sm:$0xff]
    %v45 = vld [vmem:[#allocation2] sm:$0xff]
    %v46 = vld [vmem:[#allocation2 + $0x8] sm:$0xff]
    %v47 = vld [vmem:[#allocation2 + $0x10] sm:$0xff]
    %v48 = vld [vmem:[#allocation2 + $0x18] sm:$0xff]
    %v49 = vld [vmem:[#allocation2 + $0x20] sm:$0xff]
    %v50 = vld [vmem:[#allocation2 + $0x28] sm:$0xff]
    %v51 = vld [vmem:[#allocation2 + $0x30] sm:$0xff]
    %v52 = vld [vmem:[#allocation2 + $0x38] sm:$0xff]
    %v53 = vld [vmem:[#allocation2 + $0x40] sm:$0xff]
    %v54 = vld [vmem:[#allocation2 + $0x48] sm:$0xff]
    %v55 = vld [vmem:[#allocation2 + $0x50] sm:$0xff]
    %v56 = vld [vmem:[#allocation2 + $0x58] sm:$0xff]
    %v57 = vld [vmem:[#allocation2 + $0x60] sm:$0xff]
    %v58 = vld [vmem:[#allocation2 + $0x68] sm:$0xff]
    %v59 = vld [vmem:[#allocation2 + $0x70] sm:$0xff]
    %v60 = vld [vmem:[#allocation2 + $0x78] sm:$0xff]
    %v61 = vld [vmem:[#allocation2 + $0x80] sm:$0xff]
    %v62 = vld [vmem:[#allocation2 + $0x88] sm:$0xff]
    %v63 = vld [vmem:[#allocation2 + $0x90] sm:$0xff]
    %v64 = vld [vmem:[#allocation2 + $0x98] sm:$0xff]
    %v65 = vld [vmem:[#allocation2 + $0xa0] sm:$0xff]
    %v66 = vld [vmem:[#allocation2 + $0xa8] sm:$0xff]
    %v67 = vld [vmem:[#allocation2 + $0xb0] sm:$0xff]
    %v68 = vld [vmem:[#allocation2 + $0xb8] sm:$0xff]
    %v69 = vld [vmem:[#allocation2 + $0xc0] sm:$0xff]
    %v70 = vld [vmem:[#allocation2 + $0xc8] sm:$0xff]
    %v71 = vld [vmem:[#allocation2 + $0xd0] sm:$0xff]
    %v72 = vld [vmem:[#allocation2 + $0xd8] sm:$0xff]
    %v73 = vld [vmem:[#allocation2 + $0xe0] sm:$0xff]
    %v74 = vld [vmem:[#allocation2 + $0xe8] sm:$0xff]
    %v75 = vld [vmem:[#allocation2 + $0xf0] sm:$0xff]
    %v76 = vld [vmem:[#allocation2 + $0xf8] sm:$0xff]
    %77 = vmatprep.subr.mxu0 %v76
    %78 = vmatpush1.msra.mxu0 %v75
    %79 = vmatprep.subr.mxu0 %v74
    %80 = vmatpush1.msra.mxu0 %v73
    %81 = vmatprep.subr.mxu0 %v72
    %82 = vmatpush1.msra.mxu0 %v71
    %83 = vmatprep.subr.mxu0 %v70
    %84 = vmatpush1.msra.mxu0 %v69
    %85 = vmatprep.subr.mxu0 %v68
    %86 = vmatpush1.msra.mxu0 %v67
    %87 = vmatprep.subr.mxu0 %v66
    %88 = vmatpush1.msra.mxu0 %v65
    %89 = vmatprep.subr.mxu0 %v64
    %90 = vmatpush1.msra.mxu0 %v63
    %91 = vmatprep.subr.mxu0 %v62
    %92 = vmatpush1.msra.mxu0 %v61
    %93 = vmatprep.subr.mxu0 %v60
    %94 = vmatpush1.msra.mxu0 %v59
    %95 = vmatprep.subr.mxu0 %v58
    %96 = vmatpush1.msra.mxu0 %v57
    %97 = vmatprep.subr.mxu0 %v56
    %98 = vmatpush1.msra.mxu0 %v55
    %99 = vmatprep.subr.mxu0 %v54
    %100 = vmatpush1.msra.mxu0 %v53
    %101 = vmatprep.subr.mxu0 %v52
    %102 = vmatpush1.msra.mxu0 %v51
    %103 = vmatprep.subr.mxu0 %v50
    %104 = vmatpush1.msra.mxu0 %v49
    %105 = vmatprep.subr.mxu0 %v48
    %106 = vmatpush1.msra.mxu0 %v47
    %107 = vmatprep.subr.mxu0 %v46
    %108 = vmatpush1.msra.mxu0 %v45
    %109 = vmatprep.subr.mxu0 0.0
    %110 = vmatpush2.msra.mxu0 0.0
    %111 = vmatprep.subr.mxu0 0.0
    %112 = vmatpush2.msra.mxu0 0.0
    %113 = vmatprep.subr.mxu0 0.0
    %114 = vmatpush2.msra.mxu0 0.0
    %115 = vmatprep.subr.mxu0 0.0
    %116 = vmatpush2.msra.mxu0 0.0
    %117 = vmatprep.subr.mxu0 0.0
    %118 = vmatpush2.msra.mxu0 0.0
    %119 = vmatprep.subr.mxu0 0.0
    %120 = vmatpush2.msra.mxu0 0.0
    %121 = vmatprep.subr.mxu0 0.0
    %122 = vmatpush2.msra.mxu0 0.0
    %123 = vmatprep.subr.mxu0 0.0
    %124 = vmatpush2.msra.mxu0 0.0
    %125 = vmatprep.subr.mxu0 0.0
    %126 = vmatpush2.msra.mxu0 0.0
    %127 = vmatprep.subr.mxu0 0.0
    %128 = vmatpush2.msra.mxu0 0.0
    %129 = vmatprep.subr.mxu0 0.0
    %130 = vmatpush2.msra.mxu0 0.0
    %131 = vmatprep.subr.mxu0 0.0
    %132 = vmatpush2.msra.mxu0 0.0
    %133 = vmatprep.subr.mxu0 0.0
    %134 = vmatpush2.msra.mxu0 0.0
    %135 = vmatprep.subr.mxu0 0.0
    %136 = vmatpush2.msra.mxu0 0.0
    %137 = vmatprep.subr.mxu0 0.0
    %138 = vmatpush2.msra.mxu0 0.0
    %139 = vmatprep.subr.mxu0 0.0
    %140 = vmatpush2.msra.mxu0 0.0
    %141 = vmatprep.mubr.f32.mxu0 0.0
    %142 = vmatmul.mubr.f32.gmra.mxu0 %v44
    %v143 = vpop.f32.mrf.mxu0
    %v144 = vadd.f32 0.0, %v143
    %v145 = vpop.f32.mrf.mxu0
    %v146 = vadd.f32 0.0, %v145
    %147 = vdwg.mxu0
    %v148 = vld [vmem:[%s1] sm:$0xff]
    %v149 = vld [vmem:[#allocation5] sm:$0xff]
    %v150 = vmul.f32 %v144, 2.0
    %v151 = vadd.f32 %v150, 1.0
    %153 = vset.pattern.permute.xlu0 0
    %154 = vperm.xlu0 %153, %v148
    %v155 = vpop.permute.xlu0 %154
    %v157 = vadd.f32 %v151, %v155
    %v158 = vadd.f32 %v150, 1.00001
    %v159 = vlaneseq
    %v160 = vshrl.u32 %v159, 7
    %v161 = vsub.s32 0, %v160
    %v162 = vrot.slane %v149, %v161
    %v163 = vmul.f32 %v162, %v155
    %v164 = vadd.f32 %v158, %v163
    %v165 = vmul.f32 %v157, %v157
    %v166 = vmul.f32 %v165, %v162
    %v167 = vlaneseq
    %v168 = vshrl.u32 %v167, 7
    %v169 = vsub.s32 1, %v168
    %v170 = vrot.slane %v149, %v169
    %v171 = vmul.f32 %v157, %v170
    %v172 = vmul.f32 %v171, %v150
    %v173 = vadd.f32 %v166, %v172
    %v174 = vlaneseq
    %v175 = vshrl.u32 %v174, 7
    %v176 = vsub.s32 2, %v175
    %v177 = vrot.slane %v149, %v176
    %v178 = vmul.f32 %v177, %v155
    %v179 = vadd.f32 %v173, %v178
    %v180 = vlaneseq
    %v181 = vshrl.u32 %v180, 7
    %v182 = vsub.s32 3, %v181
    %v183 = vrot.slane %v149, %v182
    %v184 = vmul.f32 %v157, %v183
    %v185 = vlaneseq
    %v186 = vshrl.u32 %v185, 7
    %v187 = vsub.s32 4, %v186
    %v188 = vrot.slane %v149, %v187
    %v189 = vmul.f32 %v188, %v146
    %v190 = vadd.f32 %v184, %v189
    %v191 = vmul.f32 %v190, %v164
    %v192 = vmul.f32 %v164, %v164
    %v193 = vsub.f32 %v192, %v179
    %v194 = vrcp.pop %v193
    %v195 = vmul.f32 %v191, %v194
    %v196 = vmul.f32 %v195, %v195
    %v197 = vadd.f32 %v196, 1.0
    %v198 = vrsqrt.pop %v197
    %v199 = vmul.f32 %v197, %v198
    %vm200 = vcmp.eq.f32.partialorder %v197, inf
    %v201 = vsel %vm200, %v197, %v199
    %vm202 = vcmp.eq.f32.partialorder %v197, 0.0
    %v203 = vand.u32 %v197, 2147483648
    %v204 = vsel %vm202, %v203, %v201
    %v205 = vadd.f32 %v195, %v204
    %v206 = vmax.f32 %v205, 1e-05
    %v207 = vlog2.pop %v206
    %v208 = vmul.f32 %v207, 0.6931472
    %v209 = vlaneseq
    %v210 = vshrl.u32 %v209, 7
    %v211 = vsub.s32 5, %v210
    %v212 = vrot.slane %v149, %v211
    %v213 = vmul.f32 %v212, %v208
    %214 = vst [vmem:[#allocation7] sm:$0xff] %v213
    // Predicated region
    $region26: #{tpu_custom_call.1} parent=1 // pred_check
      _
    $region27: #{tpu_custom_call.1} parent=1 // pred_check_branch
      %216 = sbr.rel (0) target = $region29
    $region28: #{tpu_custom_call.1} parent=1 // pred_region
      %s218 = ssub.s32 128, 128
      %219 = vsyncadd [#allocation4], %s218
      %s221 = sshll.u32 [#allocation7], 4
      %s222 = int_to_ptr.vmem [resolvable:$true] %s221
      %224 = dma.vmem_to_hbm [thread:$0]  %s222, 128, %s4, [#allocation4]
    $region29: #{tpu_custom_call.1} parent=1 // pred_fallthru
      _
    // Predicated region
    $region30: #{tpu_custom_call.1} parent=1 // pred_check
      _
    $region31: #{tpu_custom_call.1} parent=1 // pred_check_branch
      %226 = sbr.rel (0) target = $region33
    $region32: #{tpu_custom_call.1} parent=1 // pred_region
      %227 = dma.done [#allocation4], 128
    $region33: #{tpu_custom_call.1} parent=1 // pred_fallthru
      _
    %228 = vsyncpa [#allocation3], 1
    %229 = vsyncpa [#allocation6], 1
    %230 = vsyncpa [#allocation4], 1

</llo_original>
